<compile_context>
chip_gen: v7x
topology: tpu7x:2x2x1
jax: 0.10.0
libtpu: 0.0.40
codegen_flags: <defaults>
</compile_context>

<pallas_src>
import jax
import jax.numpy as jnp
from jax import lax
from jax.experimental import pallas as pl
from jax.experimental.pallas import tpu as pltpu


def _round_up(a: int, m: int) -> int:
    return ((a + m - 1) // m) * m


def _cdiv(a: int, b: int) -> int:
    return (a + b - 1) // b


# ----------------------------- activations ---------------------------------

def _make_activation(act: str):
    if act == "ReLU":
        return lambda h: jnp.maximum(h, 0.0)
    elif act == "LeakyReLU":
        # torch default negative_slope = 0.01
        return lambda h: jnp.where(h >= 0.0, h, 0.01 * h)
    elif act == "RReLU":
        # eval-mode RReLU uses the mean slope (lower+upper)/2 = (1/8 + 1/3)/2
        slope = (1.0 / 8.0 + 1.0 / 3.0) / 2.0
        return lambda h: jnp.where(h >= 0.0, h, slope * h)
    elif act == "Sigmoid":
        # jax.nn.sigmoid routes through the EUP exp path.
        return jax.nn.sigmoid
    else:
        raise RuntimeError("Non-linear layer not supported!")


# ------------------------------- kernel -------------------------------------

def _make_mlp_kernel(nlayers, n_out_rows, act_fn, compute_dtype=jnp.bfloat16):
    """Fused MLP kernel.

    Refs:
      x_ref:   (tile_v, n_in)             input dtype (voxel-major block)
      w0_ref:  (D, n_in)                  bf16 layer-0 weight (torch (out,in) layout,
                                          rows zero-padded to D)
      w_ref:   (max(nlayers-1,1), D, D)   bf16 remaining weights (zero padded)
      b_ref:   (nlayers, D, 1)            f32 biases (zero padded)
      out_ref: (n_out_rows, tile_v)       output dtype (feature-major, lane-dense)
    """

    def kernel(x_ref, w0_ref, w_ref, b_ref, out_ref):
        # bf16 operands into the MXU; f32 accumulation via preferred_element_type.
        x = x_ref[...].astype(compute_dtype)                   # (tile_v, n_in)

        # Layer 0: contract the feature axis of the voxel-major block, so the
        # result is already (D, tile_v) -> lane-dense all the way to the store.
        h32 = lax.dot_general(
            w0_ref[...], x,
            dimension_numbers=(((1,), (1,)), ((), ())),
            preferred_element_type=jnp.float32,
        ) + b_ref[0]                                           # (D, tile_v) f32

        for layer in range(1, nlayers):
            # Activation (and inference-mode Dropout == identity) between layers.
            # Computed in f32 (v5e has no bf16 VPU), stored bf16 for the next MXU op.
            h = act_fn(h32).astype(compute_dtype)              # (D, tile_v)
            h32 = jnp.dot(w_ref[layer - 1], h,
                          preferred_element_type=jnp.float32) + b_ref[layer]

        if n_out_rows < h32.shape[0]:
            h32 = h32[:n_out_rows, :]   # sublane-aligned drop of padded output rows
        out_ref[...] = h32.astype(out_ref.dtype)

    return kernel


# ------------------------------- wrapper -------------------------------------

def qmriinterp_forward(x, w0, wrest, bpack, nneurons, act="ReLU",
                       tile_v=8192, out_dtype=jnp.float32,
                       feature_major_output=False):
    """Forward pass of qmriinterp.

    x:      (V, n_in) array (voxels x input measurements, any float dtype).
    w0:     (D, n_in)            bf16 packed layer-0 weight (see pack_params).
    wrest:  (max(L-1,1), D, D)   bf16 packed remaining weights.
    bpack:  (L, D, 1)            f32 packed biases.
    Returns (V, n_out) in out_dtype, or (n_out, V) if feature_major_output=True
    (skips the final small transpose pass entirely).
    """
    V, n_in = x.shape
    nneurons = [int(n) for n in nneurons]
    nlayers = len(nneurons) - 1
    n_out = nneurons[-1]
    D = int(w0.shape[0])
    assert n_in == nneurons[0] and int(w0.shape[1]) == n_in
    assert bpack.shape[0] == nlayers and int(bpack.shape[1]) == D

    # Pad the output rows so the store fills whole packed tiles (16 rows for a
    # 16-bit out dtype, 8 rows for f32); padded rows are zero and sliced off.
    out_sub = 16 if jnp.dtype(out_dtype).itemsize == 2 else 8
    n_out_rows = min(D, _round_up(n_out, out_sub))

    # ---- generation-aware VMEM budget (valid on v7x's 64 MiB VMEM too).
    try:
        phys_vmem = int(pltpu.get_tpu_info().vmem_capacity_bytes)
    except Exception:
        phys_vmem = 64 << 20
    vmem_cap = max(int(phys_vmem * 0.4), 16 << 20)

    in_item = jnp.dtype(x.dtype).itemsize
    out_item = jnp.dtype(out_dtype).itemsize
    lane_in = _round_up(max(n_in, 1), 128)        # minor-dim lane padding in VMEM

    def vmem_need(tv):
        return (2 * tv * lane_in * in_item        # double-buffered x blocks
                + tv * lane_in * 2                # in-kernel bf16 copy of x
                + 2 * n_out_rows * tv * out_item  # double-buffered output blocks
                + 4 * D * tv * 4                  # f32/bf16 hidden-state temps
                + 2 * (w0.size * 2 + wrest.size * 2 + bpack.size * 4)
                + (2 << 20))                      # headroom

    # ---- voxel-tile selection: big tiles amortize the ~0.35us per-grid-step
    # overhead; fit the VMEM budget; keep >= 2 grid steps when V allows; and
    # prefer an even step count so both v7x TensorCores get equal work.
    tile_v = max(128, _round_up(int(tile_v), 128))
    while tile_v > 128 and vmem_need(tile_v) > vmem_cap:
        tile_v = max(128, _round_up(tile_v // 2, 128))
    tile_v = min(tile_v, max(128, _round_up(_cdiv(V, 2), 128)))
    grid_v = _cdiv(V, tile_v)
    if grid_v > 1 and grid_v % 2 == 1:
        alt = max(128, _round_up(_cdiv(V, grid_v + 1), 128))
        if _cdiv(V, alt) % 2 == 0:
            tile_v, grid_v = alt, _cdiv(V, alt)

    vmem_limit = int(min(max(vmem_need(tile_v), 16 << 20),
                         max(vmem_cap, vmem_need(tile_v))))

    kernel = _make_mlp_kernel(nlayers, n_out_rows, _make_activation(act),
                              compute_dtype=jnp.bfloat16)

    y_fm = pl.pallas_call(
        kernel,
        out_shape=jax.ShapeDtypeStruct((n_out_rows, V), out_dtype),
        grid_spec=pltpu.PrefetchScalarGridSpec(
            num_scalar_prefetch=0,
            grid=(grid_v,),
            in_specs=[
                pl.BlockSpec((tile_v, n_in), lambda i: (i, 0)),   # voxel-major x block
                pl.BlockSpec(w0.shape, lambda i: (0, 0)),          # tiny constants,
                pl.BlockSpec(wrest.shape, lambda i: (0, 0, 0)),    # replicated per step
                pl.BlockSpec(bpack.shape, lambda i: (0, 0, 0)),
            ],
            out_specs=pl.BlockSpec((n_out_rows, tile_v), lambda i: (0, i)),
        ),
        compiler_params=pltpu.CompilerParams(
            dimension_semantics=("parallel",),
            vmem_limit_bytes=vmem_limit,
        ),
    )(x, w0, wrest, bpack)

    y_fm = y_fm[:n_out, :]
    if feature_major_output:
        return y_fm                      # (n_out, V): skip the transpose pass
    return y_fm.T                        # (V, n_out): module-native layout


# --------------------------- parameter init / packing ------------------------

def init_params(key, nneurons):
    """Deterministic init mimicking torch nn.Linear default:
    U(-1/sqrt(fan_in), 1/sqrt(fan_in)); weights in torch (out, in) layout."""
    weights, biases = [], []
    nlayers = len(nneurons) - 1
    for ll in range(nlayers):
        fan_in, fan_out = nneurons[ll], nneurons[ll + 1]
        key, kw, kb = jax.random.split(key, 3)
        bound = 1.0 / (fan_in ** 0.5)
        w = jax.random.uniform(kw, (fan_out, fan_in), jnp.float32,
                               minval=-bound, maxval=bound)
        b = jax.random.uniform(kb, (fan_out,), jnp.float32,
                               minval=-bound, maxval=bound)
        weights.append(w)
        biases.append(b)
    return weights, biases


def pack_params(weights, biases, nneurons, compute_dtype=jnp.bfloat16):
    """Pad per-layer params to a common hidden width D (multiple of 16) and pack:
       w0 (D, n_in), wrest (max(L-1,1), D, D) in bf16; bpack (L, D, 1) in f32.
       Padded rows/cols are zero, so padded hidden rows never reach real outputs
       (their weight columns in the following layer are zero)."""
    nlayers = len(weights)
    nneurons = [int(n) for n in nneurons]
    n_in = nneurons[0]
    D = _round_up(max(nneurons[1:]), 16)

    w0 = jnp.zeros((D, n_in), compute_dtype)
    w0 = w0.at[: weights[0].shape[0], :].set(weights[0].astype(compute_dtype))

    wrest = jnp.zeros((max(nlayers - 1, 1), D, D), compute_dtype)
    for l in range(1, nlayers):
        fo, fi = weights[l].shape
        wrest = wrest.at[l - 1, :fo, :fi].set(weights[l].astype(compute_dtype))

    bpack = jnp.zeros((nlayers, D, 1), jnp.float32)
    for l, b in enumerate(biases):
        bpack = bpack.at[l, : b.shape[0], 0].set(b.astype(jnp.float32))
    return w0, wrest, bpack


# ------------------------------- references ----------------------------------

def reference_forward(x, weights, biases, act="ReLU"):
    """Pure-f32 reference in the module's native (V, features) layout."""
    act_fn = _make_activation(act)
    h = x.astype(jnp.float32)
    n = len(weights)
    for l in range(n):
        h = h @ weights[l].T + biases[l]
        if l < n - 1:
            h = act_fn(h)
    return h


def reference_forward_bf16(x, weights, biases, act="ReLU"):
    """Reference that mirrors the kernel numerics: bf16 MXU operands,
    f32 accumulation, f32 bias + activation, bf16 activations between layers."""
    act_fn = _make_activation(act)
    h = x.astype(jnp.bfloat16)
    n = len(weights)
    for l in range(n):
        z = jnp.dot(h, weights[l].astype(jnp.bfloat16).T,
                    preferred_element_type=jnp.float32) + biases[l]
        h = act_fn(z).astype(jnp.bfloat16) if l < n - 1 else z
    return h


# --------------------------------- main --------------------------------------

if __name__ == "__main__":
    # qmriinterp(nneurons=[16, 32, 32, 8], pdrop=0.1, act="ReLU")
    nneurons = [16, 32, 32, 8]
    act = "ReLU"

    key = jax.random.PRNGKey(0)
    key, kx = jax.random.split(key)

    V = 256  # voxels in the mini-batch; x has size voxels x input_measurements
    x = jax.random.normal(kx, (V, nneurons[0]), dtype=jnp.float32)

    weights, biases = init_params(key, nneurons)
    w0, wrest, bpack = pack_params(weights, biases, nneurons)

    y = qmriinterp_forward(x, w0, wrest, bpack, nneurons, act=act)
    y = jax.block_until_ready(y)
    assert y.shape == (V, nneurons[-1])

    # Tight check against a reference that mirrors the kernel's numerics
    # (bf16 MXU operands / f32 accumulate), plus a looser end-to-end f32 check.
    y32 = y.astype(jnp.float32)
    y_bf = reference_forward_bf16(x, weights, biases, act=act).astype(jnp.float32)
    y_f32 = reference_forward(x, weights, biases, act=act)
    assert jnp.allclose(y32, y_bf, atol=1e-2, rtol=1e-2)
    assert jnp.allclose(y32, y_f32, atol=5e-2, rtol=5e-2)

    print("KERNEL_OK")
</pallas_src>

<mosaic_0001>
module attributes {stable_mosaic.version = 11 : i64} {
  func.func @kernel(%arg0: i32, %arg1: memref<128x16xf32, #tpu.memory_space<vmem>>, %arg2: memref<32x16xbf16, #tpu.memory_space<vmem>>, %arg3: memref<2x32x32xbf16, #tpu.memory_space<vmem>>, %arg4: memref<3x32x1xf32, #tpu.memory_space<vmem>>, %arg5: memref<8x128xf32, #tpu.memory_space<vmem>>) attributes {dimension_semantics = [#tpu.dimension_semantics<parallel>], iteration_bounds = array<i64: 2>, scalar_prefetch = 0 : i64, scratch_operands = 0 : i64, tpu.core_type = #tpu.core_type<tc>, window_params = [{transform_indices = @transform_0, window_bounds = array<i64: 128, 16>}, {pipeline_mode = #tpu.pipeline_mode<synchronous>, transform_indices = @transform_1, window_bounds = array<i64: 32, 16>}, {pipeline_mode = #tpu.pipeline_mode<synchronous>, transform_indices = @transform_2, window_bounds = array<i64: 2, 32, 32>}, {pipeline_mode = #tpu.pipeline_mode<synchronous>, transform_indices = @transform_3, window_bounds = array<i64: 3, 32, 1>}, {transform_indices = @transform_4, window_bounds = array<i64: 8, 128>}]} {
    %c0 = arith.constant 0 : index
    %c0_0 = arith.constant 0 : index
    %0 = vector.load %arg1[%c0, %c0_0] : memref<128x16xf32, #tpu.memory_space<vmem>>, vector<128x16xf32>
    %1 = arith.truncf %0 : vector<128x16xf32> to vector<128x16xbf16>
    %c0_1 = arith.constant 0 : index
    %c0_2 = arith.constant 0 : index
    %2 = vector.load %arg2[%c0_1, %c0_2] : memref<32x16xbf16, #tpu.memory_space<vmem>>, vector<32x16xbf16>
    %cst = arith.constant dense<0.000000e+00> : vector<32x128xf32>
    %3 = tpu.matmul %2, %1, %cst {dimension_numbers = #tpu.dot_dimension_numbers<[1], [1], [0], [0], [0, 0, 1, 0], [], []>} : vector<32x16xbf16>, vector<128x16xbf16>, vector<32x128xf32> -> vector<32x128xf32>
    %c0_3 = arith.constant 0 : index
    %c0_4 = arith.constant 0 : index
    %c0_5 = arith.constant 0 : index
    %4 = vector.load %arg4[%c0_3, %c0_4, %c0_5] : memref<3x32x1xf32, #tpu.memory_space<vmem>>, vector<1x32x1xf32>
    %5 = vector.shape_cast %4 : vector<1x32x1xf32> to vector<32x1xf32>
    %6 = vector.broadcast %5 : vector<32x1xf32> to vector<32x128xf32>
    %7 = arith.addf %3, %6 : vector<32x128xf32>
    %cst_6 = arith.constant 0.000000e+00 : f32
    %8 = vector.broadcast %cst_6 : f32 to vector<32x128xf32>
    %9 = arith.maximumf %7, %8 : vector<32x128xf32>
    %10 = arith.truncf %9 : vector<32x128xf32> to vector<32x128xbf16>
    %c0_7 = arith.constant 0 : index
    %c0_8 = arith.constant 0 : index
    %c0_9 = arith.constant 0 : index
    %11 = vector.load %arg3[%c0_7, %c0_8, %c0_9] : memref<2x32x32xbf16, #tpu.memory_space<vmem>>, vector<1x32x32xbf16>
    %12 = vector.shape_cast %11 : vector<1x32x32xbf16> to vector<32x32xbf16>
    %cst_10 = arith.constant dense<0.000000e+00> : vector<32x128xf32>
    %13 = tpu.matmul %12, %10, %cst_10 {dimension_numbers = #tpu.dot_dimension_numbers<[1], [0], [0], [1], [0, 0, 1, 1], [], []>} : vector<32x32xbf16>, vector<32x128xbf16>, vector<32x128xf32> -> vector<32x128xf32>
    %c1 = arith.constant 1 : index
    %c0_11 = arith.constant 0 : index
    %c0_12 = arith.constant 0 : index
    %14 = vector.load %arg4[%c1, %c0_11, %c0_12] : memref<3x32x1xf32, #tpu.memory_space<vmem>>, vector<1x32x1xf32>
    %15 = vector.shape_cast %14 : vector<1x32x1xf32> to vector<32x1xf32>
    %16 = vector.broadcast %15 : vector<32x1xf32> to vector<32x128xf32>
    %17 = arith.addf %13, %16 : vector<32x128xf32>
    %cst_13 = arith.constant 0.000000e+00 : f32
    %18 = vector.broadcast %cst_13 : f32 to vector<32x128xf32>
    %19 = arith.maximumf %17, %18 : vector<32x128xf32>
    %20 = arith.truncf %19 : vector<32x128xf32> to vector<32x128xbf16>
    %c1_14 = arith.constant 1 : index
    %c0_15 = arith.constant 0 : index
    %c0_16 = arith.constant 0 : index
    %21 = vector.load %arg3[%c1_14, %c0_15, %c0_16] : memref<2x32x32xbf16, #tpu.memory_space<vmem>>, vector<1x32x32xbf16>
    %22 = vector.shape_cast %21 : vector<1x32x32xbf16> to vector<32x32xbf16>
    %cst_17 = arith.constant dense<0.000000e+00> : vector<32x128xf32>
    %23 = tpu.matmul %22, %20, %cst_17 {dimension_numbers = #tpu.dot_dimension_numbers<[1], [0], [0], [1], [0, 0, 1, 1], [], []>} : vector<32x32xbf16>, vector<32x128xbf16>, vector<32x128xf32> -> vector<32x128xf32>
    %c2 = arith.constant 2 : index
    %c0_18 = arith.constant 0 : index
    %c0_19 = arith.constant 0 : index
    %24 = vector.load %arg4[%c2, %c0_18, %c0_19] : memref<3x32x1xf32, #tpu.memory_space<vmem>>, vector<1x32x1xf32>
    %25 = vector.shape_cast %24 : vector<1x32x1xf32> to vector<32x1xf32>
    %26 = vector.broadcast %25 : vector<32x1xf32> to vector<32x128xf32>
    %27 = arith.addf %23, %26 : vector<32x128xf32>
    %28 = vector.extract_strided_slice %27 {offsets = [0, 0], sizes = [8, 128], strides = [1, 1]} : vector<32x128xf32> to vector<8x128xf32>
    %c0_20 = arith.constant 0 : index
    %c0_21 = arith.constant 0 : index
    %29 = vector.load %arg5[%c0_20, %c0_21] : memref<8x128xf32, #tpu.memory_space<vmem>>, vector<8x128xf32>
    tpu.vector_store %arg5[%c0_20, %c0_21], %28 {strides = array<i32>} : memref<8x128xf32, #tpu.memory_space<vmem>>, vector<8x128xf32>,
    return
  }
  func.func @transform_0(%arg0: i32) -> (i32, i32) {
    %c0_i32 = arith.constant 0 : i32
    %c0_i32_0 = arith.constant 0 : i32
    return %arg0, %c0_i32 : i32, i32
  }
  func.func @transform_1(%arg0: i32) -> (i32, i32) {
    %c0_i32 = arith.constant 0 : i32
    %c0_i32_0 = arith.constant 0 : i32
    %c0_i32_1 = arith.constant 0 : i32
    return %c0_i32, %c0_i32_0 : i32, i32
  }
  func.func @transform_2(%arg0: i32) -> (i32, i32, i32) {
    %c0_i32 = arith.constant 0 : i32
    %c0_i32_0 = arith.constant 0 : i32
    %c0_i32_1 = arith.constant 0 : i32
    %c0_i32_2 = arith.constant 0 : i32
    return %c0_i32, %c0_i32_0, %c0_i32_1 : i32, i32, i32
  }
  func.func @transform_3(%arg0: i32) -> (i32, i32, i32) {
    %c0_i32 = arith.constant 0 : i32
    %c0_i32_0 = arith.constant 0 : i32
    %c0_i32_1 = arith.constant 0 : i32
    %c0_i32_2 = arith.constant 0 : i32
    return %c0_i32, %c0_i32_0, %c0_i32_1 : i32, i32, i32
  }
  func.func @transform_4(%arg0: i32) -> (i32, i32) {
    %c0_i32 = arith.constant 0 : i32
    %c0_i32_0 = arith.constant 0 : i32
    return %c0_i32, %arg0 : i32, i32
  }
}

</mosaic_0001>

<llo_original>
// kernel: tpu_custom_call.1
$region0: #{tpu_custom_call.1}
  #allocation0 [shape = 'u32[]', space=smem, size = 0x4, offset = 0x4, fixed_abs, tag = 'smem constant byte address 0x4 - core index']
  #allocation1 [shape = 'u32[144,128]{1,0:T(1,128)}', space=vmem, size = 0x12000, scoped, tag = 'internal scratch']
  %s0 = inlined_call_operand.vmem [shape: f32[256,16], index: 0, kind: input, shape index: {}]
  %s1 = inlined_call_operand.vmem [shape: bf16[32,16], index: 1, kind: input, shape index: {}]
  %s2 = inlined_call_operand.vmem [shape: bf16[2,32,32], index: 2, kind: input, shape index: {}]
  %s3 = inlined_call_operand.vmem [shape: f32[3,32,1], index: 3, kind: input, shape index: {}]
  %s4 = inlined_call_operand.hbm [shape: f32[8,256], index: 4, kind: output, shape index: {}]
  %s5 = sld [smem:[#allocation0]]
  $region49: #{tpu_custom_call.1} parent=0
    _
  %s7 = ssub.s32 1, %s5
  %s8 = scalar_select 0, %s7, %s5
  $region1: #{tpu_custom_call.1} parent=0
    #allocation2 [shape = 'u8[8192]{0}', space=vmem, size = 0x2000, scoped, tag = 'output window, operand 0']
    #allocation3 [shape = 's32[2]{0}', space=sflag, size = 0x8, scoped, tag = 'scoped memory for tpu_custom_call.1']
    %9 = vsyncpa [#allocation3], 0
    %s10 = scalar_lea.sflag [#allocation3], 1
    %11 = vsyncpa %s10, 0
    loop: start=0, step=1, limit=4
    $region2: #{tpu_custom_call.1} parent=1 // loop_pre_header
      _
    $region3: #{tpu_custom_call.1} parent=1 // loop_header
      %s13 = sphi 0, %s17
      %p14 = scmp.ge.s32.totalorder %s13, 4
      %s23 = sphi 0, %s25
      %s26 = sphi 0, %s23
      %s27 = sphi 0, %s26
      %s43 = sphi 0, %s27
      %s47 = sphi 0, %s47
      %s49 = sphi 0, %s47
      %s50 = sphi 0, %s49
      %s64 = sphi 0, %s50
      %s68 = sphi 0, %s68
      %s70 = sphi 0, %s68
      %s71 = sphi 0, %s70
      %s85 = sphi 0, %s71
      %s89 = sphi 0, %s89
      %s91 = sphi 0, %s89
      %s92 = sphi 0, %s91
      %s106 = sphi 0, %s92
      %s112 = sphi 0, %s114
      %s115 = sphi 0, %s112
      %s116 = sphi 0, %s115
      %s132 = sphi 0, %s116
    $region4: #{tpu_custom_call.1} parent=1 // loop_header_branch
      %16 = sbr.rel (%p14) target = $region8
    $region5: #{tpu_custom_call.1} parent=1 // loop_body
      %s18 = ssub.s32 %s13, 1
      %s19 = ssub.s32 %s13, 2
      %s20 = sadd.s32 %s13, 1
      %s21 = ssub.s32 %s13, %s20
      %p22 = scmp.eq.s32.totalorder %s21, 0
      %s24 = sadd.s32 %s23, 1
      %s25 = scalar_select %p22, %s23, %s24
      %p28 = pneg %p22
      %p29 = scmp.eq.s32.totalorder %s13, 1
      %p30 = por %p28, %p29
      %p31 = scmp.ne.s32.totalorder %s23, %s26
      %p32 = scmp.eq.s32.totalorder %s13, 0
      %p33 = por %p31, %p32
      %p34 = scmp.ne.s32.totalorder %s23, %s26
      %p35 = scmp.eq.s32.totalorder %s18, 1
      %p36 = por %p34, %p35
      %p37 = scmp.ne.s32.totalorder %s26, %s27
      %p38 = scmp.eq.s32.totalorder %s18, 0
      %p39 = por %p37, %p38
      %p40 = scmp.ne.s32.totalorder %s26, %s27
      %p41 = scmp.eq.s32.totalorder %s19, 1
      %p42 = por %p40, %p41
      %p44 = scmp.ne.s32.totalorder %s27, %s43
      %p45 = scmp.eq.s32.totalorder %s19, 0
      %p46 = por %p44, %p45
      %s48 = sadd.s32 %s47, 1
      %p51 = scmp.eq.s32.totalorder %s13, 1
      %p52 = scmp.ne.s32.totalorder %s47, %s49
      %p53 = scmp.eq.s32.totalorder %s13, 0
      %p54 = por %p52, %p53
      %p55 = scmp.ne.s32.totalorder %s47, %s49
      %p56 = scmp.eq.s32.totalorder %s18, 1
      %p57 = por %p55, %p56
      %p58 = scmp.ne.s32.totalorder %s49, %s50
      %p59 = scmp.eq.s32.totalorder %s18, 0
      %p60 = por %p58, %p59
      %p61 = scmp.ne.s32.totalorder %s49, %s50
      %p62 = scmp.eq.s32.totalorder %s19, 1
      %p63 = por %p61, %p62
      %p65 = scmp.ne.s32.totalorder %s50, %s64
      %p66 = scmp.eq.s32.totalorder %s19, 0
      %p67 = por %p65, %p66
      %s69 = sadd.s32 %s68, 1
      %p72 = scmp.eq.s32.totalorder %s13, 1
      %p73 = scmp.ne.s32.totalorder %s68, %s70
      %p74 = scmp.eq.s32.totalorder %s13, 0
      %p75 = por %p73, %p74
      %p76 = scmp.ne.s32.totalorder %s68, %s70
      %p77 = scmp.eq.s32.totalorder %s18, 1
      %p78 = por %p76, %p77
      %p79 = scmp.ne.s32.totalorder %s70, %s71
      %p80 = scmp.eq.s32.totalorder %s18, 0
      %p81 = por %p79, %p80
      %p82 = scmp.ne.s32.totalorder %s70, %s71
      %p83 = scmp.eq.s32.totalorder %s19, 1
      %p84 = por %p82, %p83
      %p86 = scmp.ne.s32.totalorder %s71, %s85
      %p87 = scmp.eq.s32.totalorder %s19, 0
      %p88 = por %p86, %p87
      %s90 = sadd.s32 %s89, 1
      %p93 = scmp.eq.s32.totalorder %s13, 1
      %p94 = scmp.ne.s32.totalorder %s89, %s91
      %p95 = scmp.eq.s32.totalorder %s13, 0
      %p96 = por %p94, %p95
      %p97 = scmp.ne.s32.totalorder %s89, %s91
      %p98 = scmp.eq.s32.totalorder %s18, 1
      %p99 = por %p97, %p98
      %p100 = scmp.ne.s32.totalorder %s91, %s92
      %p101 = scmp.eq.s32.totalorder %s18, 0
      %p102 = por %p100, %p101
      %p103 = scmp.ne.s32.totalorder %s91, %s92
      %p104 = scmp.eq.s32.totalorder %s19, 1
      %p105 = por %p103, %p104
      %p107 = scmp.ne.s32.totalorder %s92, %s106
      %p108 = scmp.eq.s32.totalorder %s19, 0
      %p109 = por %p107, %p108
      %s110 = ssub.s32 %s13, %s20
      %p111 = scmp.eq.s32.totalorder %s110, 0
      %s113 = sadd.s32 %s112, 1
      %s114 = scalar_select %p111, %s112, %s113
      %p117 = pneg %p111
      %p118 = scmp.eq.s32.totalorder %s13, 1
      %p119 = por %p117, %p118
      %p120 = scmp.ne.s32.totalorder %s112, %s115
      %p121 = scmp.eq.s32.totalorder %s13, 0
      %p122 = por %p120, %p121
      %p123 = scmp.ne.s32.totalorder %s112, %s115
      %p124 = scmp.eq.s32.totalorder %s18, 1
      %p125 = por %p123, %p124
      %p126 = scmp.ne.s32.totalorder %s115, %s116
      %p127 = scmp.eq.s32.totalorder %s18, 0
      %p128 = por %p126, %p127
      %p129 = scmp.ne.s32.totalorder %s115, %s116
      %p130 = scmp.eq.s32.totalorder %s19, 1
      %p131 = por %p129, %p130
      %p133 = scmp.ne.s32.totalorder %s116, %s132
      %p134 = scmp.eq.s32.totalorder %s19, 0
      %p135 = por %p133, %p134
      %p136 = scmp.le.s32.totalorder 1, %s13
      %p137 = scmp.lt.s32.totalorder %s13, 3
      %p138 = pnand %p136, %p137
      %p139 = pneg %p138
      // Predicated region
      $region9: #{tpu_custom_call.1} parent=5 // pred_check
        _
      $region10: #{tpu_custom_call.1} parent=5 // pred_check_branch
        %141 = sbr.rel (%p138) target = $region12
      $region11: #{tpu_custom_call.1} parent=5 // pred_region
        %s142 = ssub.s32 %s13, 1
        // Predicated region
        $region13: #{tpu_custom_call.1} parent=11 // pred_check
          %p143 = pneg %p60
        $region14: #{tpu_custom_call.1} parent=11 // pred_check_branch
          %145 = sbr.rel (%p143) target = $region16
        $region15: #{tpu_custom_call.1} parent=11 // pred_region
          _
        $region16: #{tpu_custom_call.1} parent=11 // pred_fallthru
          _
        // Predicated region
        $region17: #{tpu_custom_call.1} parent=11 // pred_check
          %p146 = pneg %p81
        $region18: #{tpu_custom_call.1} parent=11 // pred_check_branch
          %148 = sbr.rel (%p146) target = $region20
        $region19: #{tpu_custom_call.1} parent=11 // pred_region
          _
        $region20: #{tpu_custom_call.1} parent=11 // pred_fallthru
          _
        // Predicated region
        $region21: #{tpu_custom_call.1} parent=11 // pred_check
          %p149 = pneg %p102
        $region22: #{tpu_custom_call.1} parent=11 // pred_check_branch
          %151 = sbr.rel (%p149) target = $region24
        $region23: #{tpu_custom_call.1} parent=11 // pred_region
          _
        $region24: #{tpu_custom_call.1} parent=11 // pred_fallthru
          _
      $region12: #{tpu_custom_call.1} parent=5 // pred_fallthru
        _
      %p152 = scmp.lt.s32.totalorder %s13, 2
      // Predicated region
      $region25: #{tpu_custom_call.1} parent=5 // pred_check
        %p153 = pneg %p152
      $region26: #{tpu_custom_call.1} parent=5 // pred_check_branch
        %155 = sbr.rel (%p153) target = $region28
      $region27: #{tpu_custom_call.1} parent=5 // pred_region
        // Predicated region
        $region29: #{tpu_custom_call.1} parent=27 // pred_check
          %p156 = pneg %p33
        $region30: #{tpu_custom_call.1} parent=27 // pred_check_branch
          %158 = sbr.rel (%p156) target = $region32
        $region31: #{tpu_custom_call.1} parent=27 // pred_region
          %s159 = smul.u32 16, %s13
          %p160 = scmp.lt.s32.totalorder %s159, 31
          %s161 = scalar_select %p160, %s159, 31
          %s162 = smul.addr %s161, 8
          %s163 = scalar_lea.vmem %s0, %s162
          %s164 = smul.u32 16, %s13
        $region32: #{tpu_custom_call.1} parent=27 // pred_fallthru
          _
      $region28: #{tpu_custom_call.1} parent=5 // pred_fallthru
        _
      %p165 = scmp.le.s32.totalorder 1, %s13
      %p166 = scmp.lt.s32.totalorder %s13, 3
      %p167 = pnand %p165, %p166
      %p168 = pneg %p167
      // Predicated region
      $region33: #{tpu_custom_call.1} parent=5 // pred_check
        _
      $region34: #{tpu_custom_call.1} parent=5 // pred_check_branch
        %170 = sbr.rel (%p167) target = $region36
      $region35: #{tpu_custom_call.1} parent=5 // pred_region
        %s171 = ssub.s32 %s13, 1
        %s172 = smul.u32 16, %s18
        %p173 = scmp.lt.s32.totalorder %s172, 31
        %s174 = scalar_select %p173, %s172, 31
        %s175 = smul.addr %s174, 8
        %s176 = scalar_lea.vmem %s0, %s175
        %p177 = pneg %p39
        %p178 = pneg %p36
        %p179 = pneg %p60
        %p180 = pneg %p57
        %p181 = pneg %p81
        %p182 = pneg %p78
        %p183 = pneg %p102
        %p184 = pneg %p99
        %p185 = pneg %p128
        %p186 = pneg %p125
        %s187 = sand.u32 %s115, 1
        %s188 = scalar_lea.sflag [#allocation3], %s187
        %s189 = sand.u32 %s115, 1
        %s190 = smul.addr %s189, 8
        %s191 = scalar_lea.vmem [#allocation2], %s190
        %s192 = smul.u32 16, %s18
        %p193 = scmp.lt.s32.totalorder %s192, 31
        %s194 = scalar_select %p193, %s192, 31
        %s195 = smul.addr %s194, 8
        %s196 = scalar_lea.vmem %s0, %s195
        %s197 = smul.u32 16, %s18
        %v199 = vld [vmem:[%s196] sm:$0xff]
        %v200 = vld [vmem:[%s196 + $0x8] sm:$0xff]
        %v201 = vld [vmem:[%s196 + $0x10] sm:$0xff]
        %v202 = vld [vmem:[%s196 + $0x18] sm:$0xff]
        %v203 = vld [vmem:[%s196 + $0x20] sm:$0xff]
        %v204 = vld [vmem:[%s196 + $0x28] sm:$0xff]
        %v205 = vld [vmem:[%s196 + $0x30] sm:$0xff]
        %v206 = vld [vmem:[%s196 + $0x38] sm:$0xff]
        %v207 = vld [vmem:[%s196 + $0x40] sm:$0xff]
        %v208 = vld [vmem:[%s196 + $0x48] sm:$0xff]
        %v209 = vld [vmem:[%s196 + $0x50] sm:$0xff]
        %v210 = vld [vmem:[%s196 + $0x58] sm:$0xff]
        %v211 = vld [vmem:[%s196 + $0x60] sm:$0xff]
        %v212 = vld [vmem:[%s196 + $0x68] sm:$0xff]
        %v213 = vld [vmem:[%s196 + $0x70] sm:$0xff]
        %v214 = vld [vmem:[%s196 + $0x78] sm:$0xff]
        %v215 = vpack.c.bf16 %v200, %v199
        %v216 = vpack.c.bf16 %v202, %v201
        %v217 = vpack.c.bf16 %v204, %v203
        %v218 = vpack.c.bf16 %v206, %v205
        %v219 = vpack.c.bf16 %v208, %v207
        %v220 = vpack.c.bf16 %v210, %v209
        %v221 = vpack.c.bf16 %v212, %v211
        %v222 = vpack.c.bf16 %v214, %v213
        %v223 = vld [vmem:[%s1] sm:$0xf]
        %v224 = vld [vmem:[%s1 + $0x4] sm:$0xf]
        %v225 = vld [vmem:[%s1 + $0x8] sm:$0xf]
        %v226 = vld [vmem:[%s1 + $0xc] sm:$0xf]
        %v227 = vld [vmem:[%s3] sm:$0xff]
        %v228 = vld [vmem:[%s3 + $0x8] sm:$0xff]
        %v229 = vld [vmem:[%s3 + $0x10] sm:$0xff]
        %v230 = vld [vmem:[%s3 + $0x18] sm:$0xff]
        %232 = vset.pattern.permute.xlu0 0
        %233 = vperm.xlu0 %232, %v227
        %v234 = vpop.permute.xlu0 %233
        %237 = vset.pattern.permute.xlu0 0
        %238 = vperm.xlu0 %237, %v228
        %v239 = vpop.permute.xlu0 %238
        %242 = vset.pattern.permute.xlu0 0
        %243 = vperm.xlu0 %242, %v229
        %v244 = vpop.permute.xlu0 %243
        %247 = vset.pattern.permute.xlu0 0
        %248 = vperm.xlu0 %247, %v230
        %v249 = vpop.permute.xlu0 %248
        %v255 = vunpack.c.l.b16 %v223
        %v256 = vunpack.c.l.b16 %v224
        %v257 = vunpack.c.l.b16 %v225
        %v258 = vunpack.c.l.b16 %v226
        %v259 = vpack.c.b16 %v256, %v255
        %v260 = vpack.c.b16 %v258, %v257
        %vm261 = vcmask 130048
        %v263 = vsel %vm261, %v259, 0
        %v266 = vsel %vm261, %v260, 0
        %v269 = vsel %vm261, %v215, 0
        %v272 = vsel %vm261, %v216, 0
        %v275 = vsel %vm261, %v217, 0
        %v278 = vsel %vm261, %v218, 0
        %v281 = vsel %vm261, %v219, 0
        %v284 = vsel %vm261, %v220, 0
        %v287 = vsel %vm261, %v221, 0
        %v290 = vsel %vm261, %v222, 0
        %292 = vmatprep.subr.bf16.mxu0 0
        %293 = vmatpush1.bf16.xpose.msra.mxu0 %v269
        %294 = vmatprep.subr.bf16.mxu0 0
        %295 = vmatpush1.bf16.xpose.msra.mxu0 %v272
        %296 = vmatprep.subr.bf16.mxu0 0
        %297 = vmatpush1.bf16.xpose.msra.mxu0 %v275
        %298 = vmatprep.subr.bf16.mxu0 0
        %299 = vmatpush1.bf16.xpose.msra.mxu0 %v278
        %300 = vmatprep.subr.bf16.mxu0 0
        %301 = vmatpush1.bf16.xpose.msra.mxu0 %v281
        %302 = vmatprep.subr.bf16.mxu0 0
        %303 = vmatpush1.bf16.xpose.msra.mxu0 %v284
        %304 = vmatprep.subr.bf16.mxu0 0
        %305 = vmatpush1.bf16.xpose.msra.mxu0 %v287
        %306 = vmatprep.subr.bf16.mxu0 0
        %307 = vmatpush1.bf16.xpose.msra.mxu0 %v290
        %308 = vmatprep.subr.bf16.mxu0 0
        %309 = vmatpush1.bf16.xpose.msra.mxu0 0
        %310 = vmatprep.subr.bf16.mxu0 0
        %311 = vmatpush1.bf16.xpose.msra.mxu0 0
        %312 = vmatprep.subr.bf16.mxu0 0
        %313 = vmatpush1.bf16.xpose.msra.mxu0 0
        %314 = vmatprep.subr.bf16.mxu0 0
        %315 = vmatpush1.bf16.xpose.msra.mxu0 0
        %316 = vmatprep.subr.bf16.mxu0 0
        %317 = vmatpush1.bf16.xpose.msra.mxu0 0
        %318 = vmatprep.subr.bf16.mxu0 0
        %319 = vmatpush1.bf16.xpose.msra.mxu0 0
        %320 = vmatprep.subr.bf16.mxu0 0
        %321 = vmatpush1.bf16.xpose.msra.mxu0 0
        %322 = vmatprep.subr.bf16.mxu0 0
        %323 = vmatpush1.bf16.xpose.msra.mxu0 0
        %324 = vmatprep.mubr.bf16.mxu0 0
        %325 = vmatmul.mubr.bf16.gmra.mrb[0].mxu0 %v263
        %v326 = vpop.f32.mrb[0].mxu0
        %v327 = vadd.f32 %v234, %v326
        %v328 = vpop.f32.mrb[0].mxu0
        %v329 = vpop.f32.mrb[0].mxu0
        %v330 = vadd.f32 %v239, %v329
        %v331 = vpop.f32.mrb[0].mxu0
        %332 = vmatprep.mubr.bf16.mxu0 0
        %333 = vmatmul.mubr.bf16.gmra.mrb[0].mxu0 %v266
        %v334 = vpop.f32.mrb[0].mxu0
        %v335 = vadd.f32 %v244, %v334
        %v336 = vpop.f32.mrb[0].mxu0
        %v337 = vpop.f32.mrb[0].mxu0
        %v338 = vadd.f32 %v249, %v337
        %v339 = vpop.f32.mrb[0].mxu0
        %340 = vdwg.mxu0
        %v341 = vmax.f32 %v327, 0.0
        %v342 = vmax.f32 %v330, 0.0
        %v343 = vmax.f32 %v335, 0.0
        %v344 = vmax.f32 %v338, 0.0
        %v345 = vpack.c.bf16 %v342, %v341
        %v346 = vpack.c.bf16 %v344, %v343
        %v347 = vld [vmem:[%s2] sm:$0xf]
        %v348 = vld [vmem:[%s2 + $0x4] sm:$0xf]
        %v349 = vld [vmem:[%s2 + $0x8] sm:$0xf]
        %v350 = vld [vmem:[%s2 + $0xc] sm:$0xf]
        %s351 = scalar_lea.vmem %s3, 32
        %v352 = vld [vmem:[%s351] sm:$0xff]
        %v353 = vld [vmem:[%s351 + $0x8] sm:$0xff]
        %v354 = vld [vmem:[%s351 + $0x10] sm:$0xff]
        %v355 = vld [vmem:[%s351 + $0x18] sm:$0xff]
        %357 = vset.pattern.permute.xlu0 0
        %358 = vperm.xlu0 %357, %v352
        %v359 = vpop.permute.xlu0 %358
        %362 = vset.pattern.permute.xlu0 0
        %363 = vperm.xlu0 %362, %v353
        %v364 = vpop.permute.xlu0 %363
        %367 = vset.pattern.permute.xlu0 0
        %368 = vperm.xlu0 %367, %v354
        %v369 = vpop.permute.xlu0 %368
        %372 = vset.pattern.permute.xlu0 0
        %373 = vperm.xlu0 %372, %v355
        %v374 = vpop.permute.xlu0 %373
        %v380 = vunpack.c.l.b16 %v347
        %v381 = vunpack.c.l.b16 %v348
        %v382 = vunpack.c.l.b16 %v349
        %v383 = vunpack.c.l.b16 %v350
        %v384 = vpack.c.b16 %v381, %v380
        %v385 = vpack.c.b16 %v383, %v382
        %vm386 = vcmask 261120
        %v388 = vsel %vm386, %v384, 0
        %v391 = vsel %vm386, %v385, 0
        %393 = vmatprep.subr.bf16.mxu0 0
        %394 = vmatpush1.bf16.msra.mxu0 %v345
        %395 = vmatprep.subr.bf16.mxu0 0
        %396 = vmatpush1.bf16.msra.mxu0 %v346
        %397 = vmatprep.subr.bf16.mxu0 0
        %398 = vmatpush1.bf16.msra.mxu0 0
        %399 = vmatprep.subr.bf16.mxu0 0
        %400 = vmatpush1.bf16.msra.mxu0 0
        %401 = vmatprep.subr.bf16.mxu0 0
        %402 = vmatpush1.bf16.msra.mxu0 0
        %403 = vmatprep.subr.bf16.mxu0 0
        %404 = vmatpush1.bf16.msra.mxu0 0
        %405 = vmatprep.subr.bf16.mxu0 0
        %406 = vmatpush1.bf16.msra.mxu0 0
        %407 = vmatprep.subr.bf16.mxu0 0
        %408 = vmatpush1.bf16.msra.mxu0 0
        %409 = vmatprep.subr.bf16.mxu0 0
        %410 = vmatpush1.bf16.msra.mxu0 0
        %411 = vmatprep.subr.bf16.mxu0 0
        %412 = vmatpush1.bf16.msra.mxu0 0
        %413 = vmatprep.subr.bf16.mxu0 0
        %414 = vmatpush1.bf16.msra.mxu0 0
        %415 = vmatprep.subr.bf16.mxu0 0
        %416 = vmatpush1.bf16.msra.mxu0 0
        %417 = vmatprep.subr.bf16.mxu0 0
        %418 = vmatpush1.bf16.msra.mxu0 0
        %419 = vmatprep.subr.bf16.mxu0 0
        %420 = vmatpush1.bf16.msra.mxu0 0
        %421 = vmatprep.subr.bf16.mxu0 0
        %422 = vmatpush1.bf16.msra.mxu0 0
        %423 = vmatprep.subr.bf16.mxu0 0
        %424 = vmatpush1.bf16.msra.mxu0 0
        %425 = vmatprep.mubr.bf16.mxu0 0
        %426 = vmatmul.mubr.bf16.gmra.mrb[0].mxu0 %v388
        %v427 = vpop.f32.mrb[0].mxu0
        %v428 = vadd.f32 %v359, %v427
        %v429 = vpop.f32.mrb[0].mxu0
        %v430 = vpop.f32.mrb[0].mxu0
        %v431 = vadd.f32 %v364, %v430
        %v432 = vpop.f32.mrb[0].mxu0
        %433 = vmatprep.mubr.bf16.mxu0 0
        %434 = vmatmul.mubr.bf16.gmra.mrb[0].mxu0 %v391
        %v435 = vpop.f32.mrb[0].mxu0
        %v436 = vadd.f32 %v369, %v435
        %v437 = vpop.f32.mrb[0].mxu0
        %v438 = vpop.f32.mrb[0].mxu0
        %v439 = vadd.f32 %v374, %v438
        %v440 = vpop.f32.mrb[0].mxu0
        %441 = vdwg.mxu0
        %v442 = vmax.f32 %v428, 0.0
        %v443 = vmax.f32 %v431, 0.0
        %v444 = vmax.f32 %v436, 0.0
        %v445 = vmax.f32 %v439, 0.0
        %v446 = vpack.c.bf16 %v443, %v442
        %v447 = vpack.c.bf16 %v445, %v444
        %s448 = scalar_lea.vmem %s2, 16
        %v449 = vld [vmem:[%s448] sm:$0xf]
        %v450 = vld [vmem:[%s448 + $0x4] sm:$0xf]
        %v451 = vld [vmem:[%s448 + $0x8] sm:$0xf]
        %v452 = vld [vmem:[%s448 + $0xc] sm:$0xf]
        %s453 = scalar_lea.vmem %s3, 64
        %v454 = vld [vmem:[%s453] sm:$0xff]
        %v455 = vld [vmem:[%s453 + $0x8] sm:$0xff]
        %v456 = vld [vmem:[%s453 + $0x10] sm:$0xff]
        %v457 = vld [vmem:[%s453 + $0x18] sm:$0xff]
        %459 = vset.pattern.permute.xlu0 0
        %460 = vperm.xlu0 %459, %v454
        %v461 = vpop.permute.xlu0 %460
        %464 = vset.pattern.permute.xlu0 0
        %465 = vperm.xlu0 %464, %v455
        %v466 = vpop.permute.xlu0 %465
        %468 = vset.pattern.permute.xlu0 0
        %469 = vperm.xlu0 %468, %v456
        %v470 = vpop.permute.xlu0 %469
        %472 = vset.pattern.permute.xlu0 0
        %473 = vperm.xlu0 %472, %v457
        %v474 = vpop.permute.xlu0 %473
        %v479 = vunpack.c.l.b16 %v449
        %v480 = vunpack.c.l.b16 %v450
        %v481 = vunpack.c.l.b16 %v451
        %v482 = vunpack.c.l.b16 %v452
        %v483 = vpack.c.b16 %v480, %v479
        %v484 = vpack.c.b16 %v482, %v481
        %v486 = vsel %vm386, %v483, 0
        %v489 = vsel %vm386, %v484, 0
        %491 = vmatprep.subr.bf16.mxu0 0
        %492 = vmatpush1.bf16.msra.mxu0 %v446
        %493 = vmatprep.subr.bf16.mxu0 0
        %494 = vmatpush1.bf16.msra.mxu0 %v447
        %495 = vmatprep.subr.bf16.mxu0 0
        %496 = vmatpush1.bf16.msra.mxu0 0
        %497 = vmatprep.subr.bf16.mxu0 0
        %498 = vmatpush1.bf16.msra.mxu0 0
        %499 = vmatprep.subr.bf16.mxu0 0
        %500 = vmatpush1.bf16.msra.mxu0 0
        %501 = vmatprep.subr.bf16.mxu0 0
        %502 = vmatpush1.bf16.msra.mxu0 0
        %503 = vmatprep.subr.bf16.mxu0 0
        %504 = vmatpush1.bf16.msra.mxu0 0
        %505 = vmatprep.subr.bf16.mxu0 0
        %506 = vmatpush1.bf16.msra.mxu0 0
        %507 = vmatprep.subr.bf16.mxu0 0
        %508 = vmatpush1.bf16.msra.mxu0 0
        %509 = vmatprep.subr.bf16.mxu0 0
        %510 = vmatpush1.bf16.msra.mxu0 0
        %511 = vmatprep.subr.bf16.mxu0 0
        %512 = vmatpush1.bf16.msra.mxu0 0
        %513 = vmatprep.subr.bf16.mxu0 0
        %514 = vmatpush1.bf16.msra.mxu0 0
        %515 = vmatprep.subr.bf16.mxu0 0
        %516 = vmatpush1.bf16.msra.mxu0 0
        %517 = vmatprep.subr.bf16.mxu0 0
        %518 = vmatpush1.bf16.msra.mxu0 0
        %519 = vmatprep.subr.bf16.mxu0 0
        %520 = vmatpush1.bf16.msra.mxu0 0
        %521 = vmatprep.subr.bf16.mxu0 0
        %522 = vmatpush1.bf16.msra.mxu0 0
        %523 = vmatprep.mubr.bf16.mxu0 0
        %524 = vmatmul.mubr.bf16.gmra.mrb[0].mxu0 %v486
        %v525 = vpop.f32.mrb[0].mxu0
        %v526 = vadd.f32 %v461, %v525
        %v527 = vpop.f32.mrb[0].mxu0
        %v528 = vpop.f32.mrb[0].mxu0
        %v529 = vpop.f32.mrb[0].mxu0
        %530 = vmatprep.mubr.bf16.mxu0 0
        %531 = vmatmul.mubr.bf16.gmra.mrb[0].mxu0 %v489
        %v532 = vpop.f32.mrb[0].mxu0
        %v533 = vpop.f32.mrb[0].mxu0
        %v534 = vpop.f32.mrb[0].mxu0
        %v535 = vpop.f32.mrb[0].mxu0
        %536 = vdwg.mxu0
        %537 = vst [vmem:[%s191] sm:$0xff] %v526
        %s538 = sand.u32 %s115, 1
        %s539 = scalar_lea.sflag [#allocation3], %s538
        %s540 = sand.u32 %s115, 1
        %s541 = smul.addr %s540, 8
        %s542 = scalar_lea.vmem [#allocation2], %s541
        // Predicated region
        $region37: #{tpu_custom_call.1} parent=35 // pred_check
          %p543 = pneg %p125
        $region38: #{tpu_custom_call.1} parent=35 // pred_check_branch
          %545 = sbr.rel (%p543) target = $region40
        $region39: #{tpu_custom_call.1} parent=35 // pred_region
          %s547 = ssub.s32 128, 128
          %548 = vsyncadd %s539, %s547
          %s549 = smul.addr %s18, 128
          %s550 = scalar_lea.hbm %s4, %s549
          %s552 = sshll.u32 %s542, 4
          %s553 = int_to_ptr.vmem [resolvable:$true] %s552
          %555 = dma.vmem_to_hbm [thread:$0]  %s553, 128, %s550, %s539
        $region40: #{tpu_custom_call.1} parent=35 // pred_fallthru
          _
      $region36: #{tpu_custom_call.1} parent=5 // pred_fallthru
        _
      %p556 = scmp.le.s32.totalorder 2, %s13
      // Predicated region
      $region41: #{tpu_custom_call.1} parent=5 // pred_check
        %p557 = pneg %p556
      $region42: #{tpu_custom_call.1} parent=5 // pred_check_branch
        %559 = sbr.rel (%p557) target = $region44
      $region43: #{tpu_custom_call.1} parent=5 // pred_region
        %s560 = ssub.s32 %s13, 2
        // Predicated region
        $region45: #{tpu_custom_call.1} parent=43 // pred_check
          %p561 = pneg %p131
        $region46: #{tpu_custom_call.1} parent=43 // pred_check_branch
          %563 = sbr.rel (%p561) target = $region48
        $region47: #{tpu_custom_call.1} parent=43 // pred_region
          %s564 = sand.u32 %s116, 1
          %s565 = scalar_lea.sflag [#allocation3], %s564
          %s566 = sand.u32 %s116, 1
          %s567 = smul.addr %s566, 8
          %s568 = scalar_lea.vmem [#allocation2], %s567
          %569 = dma.done %s565, 128
        $region48: #{tpu_custom_call.1} parent=43 // pred_fallthru
          _
      $region44: #{tpu_custom_call.1} parent=5 // pred_fallthru
        _
    $region6: #{tpu_custom_call.1} parent=1 // loop_footer
      %s17 = sadd.s32 1, %s13
    $region7: #{tpu_custom_call.1} parent=1 // loop_footer_branch
      %12 = sbr.rel target = $region3
    $region8: #{tpu_custom_call.1} parent=1 // loop_exit
      _
    %570 = vsyncpa [#allocation3], 1
    %s571 = scalar_lea.sflag [#allocation3], 1
    %572 = vsyncpa %s571, 1

</llo_original>
